<compile_context>
chip_gen: v6e
topology: v6e:2x2x1
jax: 0.10.0
libtpu: 0.0.40
codegen_flags: <defaults>
</compile_context>

<pallas_src>
import numpy as np
import jax
import jax.numpy as jnp
from jax.experimental import pallas as pl
from jax.experimental.pallas import tpu as pltpu

_LANES = 128

try:  # fast C Hungarian if available
    from scipy.optimize import linear_sum_assignment as _scipy_lsa
except Exception:  # pragma: no cover - scipy not installed
    _scipy_lsa = None


def _round_up(x, m):
    return ((x + m - 1) // m) * m


# -----------------------------------------------------------------------------
# Hungarian attention mask (host side).
# TODO(synk): linear sum assignment (Hungarian) is sequential/data-dependent
# and has no clean Pallas equivalent; it is computed host-side.
# -----------------------------------------------------------------------------
def _lsa_min(cost):
    """Pure-python O(n^2 m) Hungarian fallback. cost: (n, m) with n <= m.
    Returns the column assigned to each row (minimising total cost)."""
    n, m = cost.shape
    INF = float("inf")
    u = [0.0] * (n + 1)
    v = [0.0] * (m + 1)
    p = [0] * (m + 1)          # p[j]: row matched to column j (1-indexed, 0=free)
    way = [0] * (m + 1)
    for i in range(1, n + 1):
        p[0] = i
        j0 = 0
        minv = [INF] * (m + 1)
        used = [False] * (m + 1)
        while True:
            used[j0] = True
            i0 = p[j0]
            delta = INF
            j1 = 0
            for j in range(1, m + 1):
                if not used[j]:
                    cur = cost[i0 - 1, j - 1] - u[i0] - v[j]
                    if cur < minv[j]:
                        minv[j] = cur
                        way[j] = j0
                    if minv[j] < delta:
                        delta = minv[j]
                        j1 = j
            for j in range(m + 1):
                if used[j]:
                    u[p[j]] += delta
                    v[j] -= delta
                else:
                    minv[j] -= delta
            j0 = j1
            if p[j0] == 0:
                break
        while j0 != 0:
            j1 = way[j0]
            p[j0] = p[j1]
            j0 = j1
    ans = np.zeros(n, dtype=np.int64)
    for j in range(1, m + 1):
        if p[j] != 0:
            ans[p[j] - 1] = j - 1
    return ans


def _hungarian_np(pred, src_ns, tgt_ns):
    """Binary assignment matrices maximising pred over each valid submatrix."""
    B, N1, N2 = pred.shape
    out = np.zeros((B, N1, N2), dtype=np.float32)
    for b in range(B):
        n, m = int(src_ns[b]), int(tgt_ns[b])
        if n == 0 or m == 0:
            continue
        sub = np.asarray(pred[b, :n, :m], dtype=np.float64)
        if _scipy_lsa is not None:
            r, c = _scipy_lsa(-sub)                 # maximise pred
            out[b, r, c] = 1.0
        else:
            if n <= m:
                cols = _lsa_min(-sub)
                out[b, np.arange(n), cols] = 1.0
            else:
                rows = _lsa_min(-sub.T)
                out[b, rows, np.arange(m)] = 1.0
    return out


# -----------------------------------------------------------------------------
# Pallas kernels: masked BCE over lane-dense (block_rows, 128) slabs.
# Each grid step writes an (8, 128) per-block partial sum (VPU adds only);
# the single global reduce + division happen in the wrapper.
# -----------------------------------------------------------------------------
def _hung_bce_hard_kernel(pred_ref, code_ref, out_ref):
    """Hard-{0,1} gt path. code: 0 (z=0), 1 (z=1, gt=0), 2 (gt=1)."""
    pred = pred_ref[...]                              # (br, 128) f32
    code = code_ref[...].astype(jnp.float32)          # (br, 128) int8 -> f32
    # Single clamped log (valid only for hard gt):
    #   code==2 : -max(log(pred),   -100)
    #   code==1 : -max(log(1-pred), -100)
    #   code==0 : 0   (pred must lie in [0,1], as asserted by the PyTorch module)
    arg = jnp.where(code > 1.5, pred, 1.0 - pred)
    term = -jnp.maximum(jnp.log(arg), -100.0)
    bce = jnp.where(code > 0.5, term, 0.0)
    br = bce.shape[0]
    out_ref[0] = jnp.sum(bce.reshape(br // 8, 8, _LANES), axis=0)


def _hung_bce_soft_kernel(pred_ref, gt_ref, z_ref, out_ref):
    """Fallback for soft gt in [0,1]: full two-log BCE, f32 inputs."""
    pred = pred_ref[...]
    gt = gt_ref[...]
    z = z_ref[...]
    pm = z * pred
    gm = z * gt
    # F.binary_cross_entropy semantics: each log term clamped at -100, so
    # gm == 0 / (1 - gm) == 0 entries contribute exactly 0 (no 0*inf NaN).
    log_p = jnp.maximum(jnp.log(pm), -100.0)
    log_1mp = jnp.maximum(jnp.log(1.0 - pm), -100.0)
    bce = -(gm * log_p + (1.0 - gm) * log_1mp)
    br = bce.shape[0]
    out_ref[0] = jnp.sum(bce.reshape(br // 8, 8, _LANES), axis=0)


def permutation_loss_hung(pred_dsmat, gt_perm, src_ns, tgt_ns, *,
                          block_rows=2048, hard_gt=True):
    """Averaged permutation loss with Hungarian attention. Returns f32 scalar.

    hard_gt=True assumes gt_perm (and hence Z) is exactly {0,1} (a partial
    permutation matrix), enabling the int8-coded single-log fast path.  Set
    hard_gt=False for soft ground truth.
    """
    B, N1, N2 = pred_dsmat.shape
    pred_f = pred_dsmat.astype(jnp.float32)
    gt_f = gt_perm.astype(jnp.float32)
    src_ns = src_ns.astype(jnp.int32)
    tgt_ns = tgt_ns.astype(jnp.int32)

    # Lane-dense layout: flatten to (rows, 128); zero padding contributes 0.
    total = B * N1 * N2
    rows = pl.cdiv(total, _LANES)
    rows32 = _round_up(rows, 32)                   # int8 tile needs rows % 32

    br = _round_up(min(block_rows, rows32), 32)
    # Keep >= 2 (ideally 4) grid steps so both v7x TensorCores get work, but
    # never shrink blocks below ~512 rows (per-step overhead dominates there).
    if rows32 >= 4 * 512:
        br = min(br, _round_up(pl.cdiv(rows32, 4), 32))
    elif rows32 >= 2 * 512:
        br = min(br, _round_up(pl.cdiv(rows32, 2), 32))
    rows_padded = _round_up(rows32, br)
    num_blocks = rows_padded // br

    def to_tiles(x):
        flat = jnp.ravel(x)
        flat = jnp.pad(flat, (0, rows_padded * _LANES - total))
        return flat.reshape(rows_padded, _LANES)

    # Dispatch the pred relayout asynchronously so it overlaps the host solve.
    pred_t = to_tiles(pred_f)

    # Hungarian attention mask, host side (blocking device->host for pred).
    dis_pred = jnp.asarray(
        _hungarian_np(np.asarray(jax.device_get(pred_f)),
                      np.asarray(jax.device_get(src_ns)),
                      np.asarray(jax.device_get(tgt_ns))))

    # Validity mask: rows < src_ns[b], cols < tgt_ns[b].
    valid = ((jnp.arange(N1)[None, :, None] < src_ns[:, None, None]) &
             (jnp.arange(N2)[None, None, :] < tgt_ns[:, None, None]))

    if hard_gt:
        # Z = min(dis + gt, 1) in {0,1}; gt=1 implies Z=1, so
        # code = Z + gt  in {0,1,2}  (restricted to the valid region).
        z_on = valid & ((dis_pred + gt_f) > 0.5)
        is_gt = valid & (gt_f > 0.5)
        code = (z_on.astype(jnp.int8) + is_gt.astype(jnp.int8))
        operands = (pred_t, to_tiles(code))
        kernel = _hung_bce_hard_kernel
    else:
        z = jnp.where(valid, jnp.minimum(dis_pred + gt_f, 1.0), 0.0)
        operands = (pred_t, to_tiles(gt_f), to_tiles(z.astype(jnp.float32)))
        kernel = _hung_bce_soft_kernel

    # Compiler params: raise scoped-VMEM limit only when a huge user block
    # would overflow v5e's 16 MiB default (double-buffered inputs).
    block_in_bytes = br * _LANES * sum(int(o.dtype.itemsize) for o in operands)
    vmem_est = 2 * block_in_bytes + 2 * 8 * _LANES * 4
    cp_kwargs = dict(dimension_semantics=("parallel",))
    if vmem_est > (12 << 20):
        cp_kwargs["vmem_limit_bytes"] = min(int(vmem_est * 2), 48 << 20)
    compiler_params = pltpu.CompilerParams(**cp_kwargs)

    partials = pl.pallas_call(
        kernel,
        out_shape=jax.ShapeDtypeStruct((num_blocks, 8, _LANES), jnp.float32),
        grid_spec=pltpu.PrefetchScalarGridSpec(
            num_scalar_prefetch=0,
            grid=(num_blocks,),
            in_specs=[pl.BlockSpec((br, _LANES), lambda i: (i, 0))] * len(operands),
            out_specs=pl.BlockSpec((1, 8, _LANES), lambda i: (i, 0, 0)),
        ),
        compiler_params=compiler_params,
    )(*operands)

    loss_sum = jnp.sum(partials)
    # Division unguarded: all-zero src_ns yields NaN, matching PyTorch.
    n_sum = jnp.sum(src_ns).astype(jnp.float32)
    return loss_sum / n_sum


# -----------------------------------------------------------------------------
# Pure numpy reference mirroring the PyTorch forward (reduction='sum' per b).
# -----------------------------------------------------------------------------
def _reference(pred, gt, src_ns, tgt_ns):
    pred = np.asarray(jax.device_get(pred), np.float64)
    gt = np.asarray(jax.device_get(gt), np.float64)
    src = np.asarray(jax.device_get(src_ns)).astype(np.int64)
    tgt = np.asarray(jax.device_get(tgt_ns)).astype(np.int64)
    dis = _hungarian_np(pred, src, tgt).astype(np.float64)
    ali = np.minimum(dis + gt, 1.0)
    pred_m = ali * pred
    gt_m = ali * gt
    loss, n_sum = 0.0, 0.0
    with np.errstate(divide="ignore"):
        for b in range(pred.shape[0]):
            p = pred_m[b, :src[b], :tgt[b]]
            g = gt_m[b, :src[b], :tgt[b]]
            lp = np.maximum(np.log(p), -100.0)
            l1p = np.maximum(np.log(1.0 - p), -100.0)
            loss += float(np.sum(-(g * lp + (1.0 - g) * l1p)))
            n_sum += float(src[b])
    return loss / n_sum


if __name__ == "__main__":
    key = jax.random.PRNGKey(0)
    B, N1, N2 = 3, 10, 12
    src_ns = jnp.array([6, 10, 5], dtype=jnp.int32)
    tgt_ns = jnp.array([9, 12, 8], dtype=jnp.int32)

    k_pred, k_perm = jax.random.split(key)
    # predicted doubly-stochastic-ish matrix, values strictly in (0, 1)
    pred = jax.random.uniform(k_pred, (B, N1, N2), dtype=jnp.float32,
                              minval=0.01, maxval=0.99)

    # ground-truth (partial) permutation matrices respecting src_ns / tgt_ns
    gt_np = np.zeros((B, N1, N2), dtype=np.float32)
    for b in range(B):
        s, t = int(src_ns[b]), int(tgt_ns[b])
        cols = np.asarray(jax.random.permutation(jax.random.fold_in(k_perm, b), t))[:s]
        gt_np[b, np.arange(s), cols] = 1.0
    gt = jnp.asarray(gt_np)

    ref = _reference(pred, gt, src_ns, tgt_ns)

    # Fast path: hard {0,1} gt, int8-coded single-log kernel.
    loss_hard = permutation_loss_hung(pred, gt, src_ns, tgt_ns)
    jax.block_until_ready(loss_hard)
    assert np.allclose(np.asarray(loss_hard), ref, rtol=1e-5, atol=1e-5), \
        (float(loss_hard), ref)

    # Fallback path: soft-gt two-log kernel must agree on hard gt too.
    loss_soft = permutation_loss_hung(pred, gt, src_ns, tgt_ns, hard_gt=False)
    jax.block_until_ready(loss_soft)
    assert np.allclose(np.asarray(loss_soft), ref, rtol=1e-5, atol=1e-5), \
        (float(loss_soft), ref)

    print("KERNEL_OK")
</pallas_src>

<mosaic_0001>
module attributes {stable_mosaic.version = 11 : i64} {
  func.func @_hung_bce_hard_kernel(%arg0: i32, %arg1: memref<32x128xf32, #tpu.memory_space<vmem>>, %arg2: memref<32x128xi8, #tpu.memory_space<vmem>>, %arg3: memref<1x8x128xf32, #tpu.memory_space<vmem>>) attributes {dimension_semantics = [#tpu.dimension_semantics<parallel>], iteration_bounds = array<i64: 1>, scalar_prefetch = 0 : i64, scratch_operands = 0 : i64, tpu.core_type = #tpu.core_type<tc>, window_params = [{transform_indices = @transform_0, window_bounds = array<i64: 32, 128>}, {transform_indices = @transform_1, window_bounds = array<i64: 32, 128>}, {transform_indices = @transform_2, window_bounds = array<i64: 1, 8, 128>}]} {
    %c0 = arith.constant 0 : index
    %c0_0 = arith.constant 0 : index
    %0 = vector.load %arg1[%c0, %c0_0] : memref<32x128xf32, #tpu.memory_space<vmem>>, vector<32x128xf32>
    %c0_1 = arith.constant 0 : index
    %c0_2 = arith.constant 0 : index
    %1 = vector.load %arg2[%c0_1, %c0_2] : memref<32x128xi8, #tpu.memory_space<vmem>>, vector<32x128xi8>
    %2 = arith.sitofp %1 : vector<32x128xi8> to vector<32x128xf32>
    %cst = arith.constant 1.500000e+00 : f32
    %3 = vector.broadcast %cst : f32 to vector<32x128xf32>
    %4 = arith.cmpf ogt, %2, %3 : vector<32x128xf32>
    %cst_3 = arith.constant 1.000000e+00 : f32
    %5 = vector.broadcast %cst_3 : f32 to vector<32x128xf32>
    %6 = arith.subf %5, %0 : vector<32x128xf32>
    %7 = arith.select %4, %0, %6 : vector<32x128xi1>, vector<32x128xf32>
    %8 = math.log %7 : vector<32x128xf32>
    %cst_4 = arith.constant -1.000000e+02 : f32
    %9 = vector.broadcast %cst_4 : f32 to vector<32x128xf32>
    %10 = arith.maximumf %8, %9 : vector<32x128xf32>
    %cst_5 = arith.constant 0.000000e+00 : f32
    %11 = vector.broadcast %cst_5 : f32 to vector<32x128xf32>
    %12 = arith.subf %11, %10 : vector<32x128xf32>
    %cst_6 = arith.constant 5.000000e-01 : f32
    %13 = vector.broadcast %cst_6 : f32 to vector<32x128xf32>
    %14 = arith.cmpf ogt, %2, %13 : vector<32x128xf32>
    %cst_7 = arith.constant 0.000000e+00 : f32
    %15 = vector.broadcast %cst_7 : f32 to vector<32x128xf32>
    %16 = arith.select %14, %12, %15 : vector<32x128xi1>, vector<32x128xf32>
    %17 = vector.shape_cast %16 : vector<32x128xf32> to vector<4x8x128xf32>
    %cst_8 = arith.constant dense<0.000000e+00> : vector<8x128xf32>
    %18 = vector.multi_reduction <add>, %17, %cst_8 [0] : vector<4x8x128xf32> to vector<8x128xf32>
    %c0_9 = arith.constant 0 : index
    %c0_10 = arith.constant 0 : index
    %c0_11 = arith.constant 0 : index
    %19 = vector.load %arg3[%c0_9, %c0_10, %c0_11] : memref<1x8x128xf32, #tpu.memory_space<vmem>>, vector<1x8x128xf32>
    %20 = vector.shape_cast %19 : vector<1x8x128xf32> to vector<8x128xf32>
    %21 = vector.shape_cast %18 : vector<8x128xf32> to vector<1x8x128xf32>
    tpu.vector_store %arg3[%c0_9, %c0_10, %c0_11], %21 {strides = array<i32>} : memref<1x8x128xf32, #tpu.memory_space<vmem>>, vector<1x8x128xf32>,
    return
  }
  func.func @transform_0(%arg0: i32) -> (i32, i32) {
    %c0_i32 = arith.constant 0 : i32
    %c0_i32_0 = arith.constant 0 : i32
    return %arg0, %c0_i32 : i32, i32
  }
  func.func @transform_1(%arg0: i32) -> (i32, i32) {
    %c0_i32 = arith.constant 0 : i32
    %c0_i32_0 = arith.constant 0 : i32
    return %arg0, %c0_i32 : i32, i32
  }
  func.func @transform_2(%arg0: i32) -> (i32, i32, i32) {
    %c0_i32 = arith.constant 0 : i32
    %c0_i32_0 = arith.constant 0 : i32
    %c0_i32_1 = arith.constant 0 : i32
    return %arg0, %c0_i32, %c0_i32_0 : i32, i32, i32
  }
}

</mosaic_0001>

<llo_original>
// kernel: tpu_custom_call.1
$region0: #{tpu_custom_call.1}
  #allocation0 [shape = 'u32[]', space=smem, size = 0x4, offset = 0x4, fixed_abs, tag = 'smem constant byte address 0x4 - core index']
  #allocation1 [shape = 'u32[144,128]{1,0:T(1,128)}', space=vmem, size = 0x12000, scoped, tag = 'internal scratch']
  %s0 = inlined_call_operand.hbm [shape: f32[32,128], index: 0, kind: input, shape index: {}]
  %s1 = inlined_call_operand.hbm [shape: s8[32,128], index: 1, kind: input, shape index: {}]
  %s2 = inlined_call_operand.hbm [shape: f32[1,8,128], index: 2, kind: output, shape index: {}]
  %s3 = sld [smem:[#allocation0]]
  $region26: #{tpu_custom_call.1} parent=0
    _
  %s5 = ssub.s32 1, %s3
  %s6 = scalar_select 0, %s5, %s3
  $region1: #{tpu_custom_call.1} parent=0
    #allocation2 [shape = 'u8[16384]{0}', space=vmem, size = 0x4000, scoped, tag = 'input window, operand 0, single buffered']
    #allocation3 [shape = 's32[1]{0}', space=sflag, size = 0x4, scoped, tag = 'scoped memory for tpu_custom_call.1']
    #allocation4 [shape = 's32[1]{0}', space=sflag, size = 0x4, scoped, tag = 'scoped memory for tpu_custom_call.1']
    #allocation5 [shape = 'u8[4096]{0}', space=vmem, size = 0x1000, scoped, tag = 'input window, operand 1, single buffered']
    #allocation6 [shape = 's32[1]{0}', space=sflag, size = 0x4, scoped, tag = 'scoped memory for tpu_custom_call.1']
    #allocation7 [shape = 'u8[4096]{0}', space=vmem, size = 0x1000, scoped, tag = 'output window, operand 0, single buffered']
    %7 = vsyncpa [#allocation3], 0
    %8 = vsyncpa [#allocation6], 0
    %9 = vsyncpa [#allocation4], 0
    // Predicated region
    $region2: #{tpu_custom_call.1} parent=1 // pred_check
      _
    $region3: #{tpu_custom_call.1} parent=1 // pred_check_branch
      %11 = sbr.rel (0) target = $region5
    $region4: #{tpu_custom_call.1} parent=1 // pred_region
      %s13 = ssub.s32 512, 512
      %14 = vsyncadd [#allocation3], %s13
      %s15 = sshll.u32 [#allocation2], 4
      %s16 = int_to_ptr.vmem [resolvable:$true] %s15
      %21 = dma.hbm_to_vmem [thread:$0]  %s0, 512, %s16, [#allocation3], 128, 128, 8
    $region5: #{tpu_custom_call.1} parent=1 // pred_fallthru
      _
    // Predicated region
    $region6: #{tpu_custom_call.1} parent=1 // pred_check
      _
    $region7: #{tpu_custom_call.1} parent=1 // pred_check_branch
      %23 = sbr.rel (0) target = $region9
    $region8: #{tpu_custom_call.1} parent=1 // pred_region
      %s25 = ssub.s32 128, 128
      %26 = vsyncadd [#allocation6], %s25
      %s28 = sshll.u32 [#allocation5], 4
      %s29 = int_to_ptr.vmem [resolvable:$true] %s28
      %31 = dma.hbm_to_vmem [thread:$0]  %s1, 128, %s29, [#allocation6]
    $region9: #{tpu_custom_call.1} parent=1 // pred_fallthru
      _
    // Predicated region
    $region10: #{tpu_custom_call.1} parent=1 // pred_check
      _
    $region11: #{tpu_custom_call.1} parent=1 // pred_check_branch
      %33 = sbr.rel (0) target = $region13
    $region12: #{tpu_custom_call.1} parent=1 // pred_region
      %34 = dma.done [#allocation3], 512
    $region13: #{tpu_custom_call.1} parent=1 // pred_fallthru
      _
    // Predicated region
    $region14: #{tpu_custom_call.1} parent=1 // pred_check
      _
    $region15: #{tpu_custom_call.1} parent=1 // pred_check_branch
      %36 = sbr.rel (0) target = $region17
    $region16: #{tpu_custom_call.1} parent=1 // pred_region
      %37 = dma.done [#allocation6], 128
    $region17: #{tpu_custom_call.1} parent=1 // pred_fallthru
      _
    %v38 = vld [vmem:[#allocation2] sm:$0xff]
    %v39 = vld [vmem:[#allocation2 + $0x8] sm:$0xff]
    %v40 = vld [vmem:[#allocation2 + $0x10] sm:$0xff]
    %v41 = vld [vmem:[#allocation2 + $0x18] sm:$0xff]
    %v42 = vld [vmem:[#allocation5] sm:$0xff]
    %v43 = vunpack.c.0.s8 %v42
    %v44 = vunpack.c.1.s8 %v42
    %v45 = vunpack.c.2.s8 %v42
    %v46 = vunpack.c.3.s8 %v42
    %v47 = vcvt.s32.f32 %v43
    %v48 = vcvt.s32.f32 %v44
    %v49 = vcvt.s32.f32 %v45
    %v50 = vcvt.s32.f32 %v46
    %vm51 = vcmp.gt.f32.partialorder %v47, 1.5
    %vm52 = vcmp.gt.f32.partialorder %v48, 1.5
    %vm53 = vcmp.gt.f32.partialorder %v49, 1.5
    %vm54 = vcmp.gt.f32.partialorder %v50, 1.5
    %v55 = vsub.f32 1.0, %v38
    %v56 = vsub.f32 1.0, %v39
    %v57 = vsub.f32 1.0, %v40
    %v58 = vsub.f32 1.0, %v41
    %v59 = vsel %vm51, %v38, %v55
    %v60 = vsel %vm52, %v39, %v56
    %v61 = vsel %vm53, %v40, %v57
    %v62 = vsel %vm54, %v41, %v58
    %v63 = vlog2.pop %v59
    %v64 = vmul.f32 %v63, 0.6931472
    %v65 = vlog2.pop %v60
    %v66 = vmul.f32 %v65, 0.6931472
    %v67 = vlog2.pop %v61
    %v68 = vmul.f32 %v67, 0.6931472
    %v69 = vlog2.pop %v62
    %v70 = vmul.f32 %v69, 0.6931472
    %v71 = vmax.f32 %v64, -100.0
    %v72 = vmax.f32 %v66, -100.0
    %v73 = vmax.f32 %v68, -100.0
    %v74 = vmax.f32 %v70, -100.0
    %v75 = vsub.f32 0.0, %v71
    %v76 = vsub.f32 0.0, %v72
    %v77 = vsub.f32 0.0, %v73
    %v78 = vsub.f32 0.0, %v74
    %vm79 = vcmp.gt.f32.partialorder %v47, 0.5
    %vm80 = vcmp.gt.f32.partialorder %v48, 0.5
    %vm81 = vcmp.gt.f32.partialorder %v49, 0.5
    %vm82 = vcmp.gt.f32.partialorder %v50, 0.5
    %v83 = vsel %vm79, %v75, 0.0
    %v84 = vsel %vm80, %v76, 0.0
    %v85 = vsel %vm81, %v77, 0.0
    %v86 = vsel %vm82, %v78, 0.0
    %v87 = vadd.f32 %v83, %v84
    %v88 = vadd.f32 %v87, %v85
    %v89 = vadd.f32 %v88, %v86
    %90 = vst [vmem:[#allocation7] sm:$0xff] %v89
    // Predicated region
    $region18: #{tpu_custom_call.1} parent=1 // pred_check
      _
    $region19: #{tpu_custom_call.1} parent=1 // pred_check_branch
      %92 = sbr.rel (0) target = $region21
    $region20: #{tpu_custom_call.1} parent=1 // pred_region
      %s94 = ssub.s32 128, 128
      %95 = vsyncadd [#allocation4], %s94
      %s97 = sshll.u32 [#allocation7], 4
      %s98 = int_to_ptr.vmem [resolvable:$true] %s97
      %100 = dma.vmem_to_hbm [thread:$0]  %s98, 128, %s2, [#allocation4]
    $region21: #{tpu_custom_call.1} parent=1 // pred_fallthru
      _
    // Predicated region
    $region22: #{tpu_custom_call.1} parent=1 // pred_check
      _
    $region23: #{tpu_custom_call.1} parent=1 // pred_check_branch
      %102 = sbr.rel (0) target = $region25
    $region24: #{tpu_custom_call.1} parent=1 // pred_region
      %103 = dma.done [#allocation4], 128
    $region25: #{tpu_custom_call.1} parent=1 // pred_fallthru
      _
    %104 = vsyncpa [#allocation3], 1
    %105 = vsyncpa [#allocation6], 1
    %106 = vsyncpa [#allocation4], 1

</llo_original>
